<compile_context>
chip_gen: v7x
topology: tpu7x:2x2x1
jax: 0.10.0
libtpu: 0.0.40
codegen_flags: <defaults>
</compile_context>

<pallas_src>
import functools

import jax
import jax.numpy as jnp
from jax import lax
from jax.experimental import pallas as pl
from jax.experimental.pallas import tpu as pltpu


def _round_up(v, m):
    return (v + m - 1) // m * m


def _spatial_attention_kernel(x_ref, w_ref, o_ref, s_ref, acc_ref, *,
                              n_t, tile_hw, inv_hw, use_mxu):
    # x_ref:   (C, T)       current HW tile of one batch element
    # w_ref:   (1, C) [mxu] or (C, 1) [vpu]   1x1-conv weight
    # o_ref:   (1, HW_pad)  output row, resident across the HW-tile axis
    # s_ref:   (1, HW_pad)  f32 scratch holding s = w . x for the whole image
    # acc_ref: (1, 1)       f32 scratch, running sum of s over HW tiles
    t = pl.program_id(1)

    @pl.when(t == 0)
    def _init():
        acc_ref[...] = jnp.zeros_like(acc_ref)

    x = x_ref[...].astype(jnp.float32)
    w = w_ref[...].astype(jnp.float32)

    if use_mxu:
        # (1, C) @ (C, T) -> (1, T) on the MXU.
        s = jnp.dot(w, x, preferred_element_type=jnp.float32)
    else:
        # Tiny C: VPU multiply + sublane reduce; skip the degenerate matvec.
        s = jnp.sum(x * w, axis=0, keepdims=True)          # (1, T)

    off = pl.multiple_of(t * tile_hw, tile_hw)
    s_ref[:, pl.ds(off, tile_hw)] = s
    acc_ref[...] += jnp.sum(s, axis=1, keepdims=True)

    @pl.when(t == n_t - 1)
    def _finalize():
        # mean_HW(w @ x) == w @ mean_c(x); zero-padded lanes contribute 0 to
        # the sum, so dividing by the true HW gives the exact mean.
        bias = acc_ref[...] * inv_hw                        # (1, 1)
        o_ref[...] = jax.nn.sigmoid(s_ref[...] + bias).astype(o_ref.dtype)


def spatial_attention(x, weight, *, tile_hw=None):
    """x: (B, C, H, W); weight: (1, C, 1, 1) conv1x1 weight, no bias."""
    B, C, H, W = x.shape
    HW = H * W

    # Lane-dense tiling of the flattened spatial axis.
    if tile_hw is None:
        # Cap a single (C, T) input block at ~4 MiB (double-buffered ~8 MiB)
        # so the pipeline fits scoped VMEM on all generations (incl. v7x).
        cap = (4 * 1024 * 1024) // max(C * x.dtype.itemsize, 1)
        cap = max(512, min(8192, (cap // 128) * 128))
        tile_hw = min(_round_up(HW, 128), cap)
    tile_hw = _round_up(tile_hw, 128)
    hw_pad = _round_up(HW, tile_hw)
    n_t = hw_pad // tile_hw

    x_flat = x.reshape(B, C, HW)
    if hw_pad != HW:
        # Zero-pad lanes; zero columns contribute nothing to w.x or its sum.
        x_flat = jnp.pad(x_flat, ((0, 0), (0, 0), (0, hw_pad - HW)))

    use_mxu = C >= 32
    if use_mxu:
        w_arr = weight.reshape(1, C)
        w_spec = pl.BlockSpec((1, C), lambda b, t: (0, 0))
    else:
        w_arr = weight.reshape(C, 1)
        w_spec = pl.BlockSpec((C, 1), lambda b, t: (0, 0))

    kernel = functools.partial(
        _spatial_attention_kernel,
        n_t=n_t, tile_hw=tile_hw, inv_hw=1.0 / float(HW), use_mxu=use_mxu)

    out_flat = pl.pallas_call(
        kernel,
        out_shape=jax.ShapeDtypeStruct((B, 1, hw_pad), x.dtype),
        grid_spec=pltpu.PrefetchScalarGridSpec(
            num_scalar_prefetch=0,
            grid=(B, n_t),
            in_specs=[
                pl.BlockSpec((pl.Squeezed(), C, tile_hw),
                             lambda b, t: (b, 0, t)),
                w_spec,
            ],
            out_specs=pl.BlockSpec((pl.Squeezed(), 1, hw_pad),
                                   lambda b, t: (b, 0, 0)),
            scratch_shapes=[
                pltpu.VMEM((1, hw_pad), jnp.float32),   # s = w @ x
                pltpu.VMEM((1, 1), jnp.float32),        # running sum of s
            ],
        ),
        compiler_params=pltpu.CompilerParams(
            dimension_semantics=("parallel", "arbitrary"),
            vmem_limit_bytes=32 * 1024 * 1024,
        ),
        cost_estimate=pl.CostEstimate(
            flops=2 * B * C * HW + 2 * B * HW,
            bytes_accessed=(B * C * HW * x.dtype.itemsize
                            + B * HW * x.dtype.itemsize
                            + C * weight.dtype.itemsize),
            transcendentals=B * HW,
        ),
    )(x_flat, w_arr)

    return out_flat[:, :, :HW].reshape(B, 1, H, W)


def spatial_attention_ref(x, weight):
    """Pure-JAX reference mirroring the PyTorch module."""
    m = jnp.mean(x, axis=(2, 3), keepdims=True)
    y = x + m
    w = weight.reshape(1, -1)                               # (1, C)
    out = jnp.einsum("oc,bchw->bohw", w, y)
    return jax.nn.sigmoid(out)


if __name__ == "__main__":
    key = jax.random.PRNGKey(0)
    k1, k2, k3, k4, k5, k6 = jax.random.split(key, 6)

    # Case 1: tiny C -> VPU channel-reduce path; HW multiple of 128.
    x1 = jax.random.normal(k1, (2, 4, 16, 16), dtype=jnp.float32)
    w1 = jax.random.normal(k2, (1, 4, 1, 1), dtype=jnp.float32) * 0.1
    o1 = jax.block_until_ready(spatial_attention(x1, w1))
    r1 = spatial_attention_ref(x1, w1)
    assert o1.shape == (2, 1, 16, 16)
    assert jnp.allclose(o1, r1, atol=1e-5, rtol=1e-5)

    # Case 2: larger C -> MXU path; HW (64) not a multiple of 128 -> padding.
    x2 = jax.random.normal(k3, (2, 64, 8, 8), dtype=jnp.float32)
    w2 = jax.random.normal(k4, (1, 64, 1, 1), dtype=jnp.float32) * 0.1
    o2 = jax.block_until_ready(spatial_attention(x2, w2))
    r2 = spatial_attention_ref(x2, w2)
    assert jnp.allclose(o2, r2, atol=1e-5, rtol=1e-5)

    # Case 3: force multiple HW tiles -> accumulator + revisit epilogue.
    x3 = jax.random.normal(k5, (1, 4, 32, 32), dtype=jnp.float32)
    w3 = jax.random.normal(k6, (1, 4, 1, 1), dtype=jnp.float32) * 0.1
    o3 = jax.block_until_ready(spatial_attention(x3, w3, tile_hw=256))
    r3 = spatial_attention_ref(x3, w3)
    assert jnp.allclose(o3, r3, atol=1e-5, rtol=1e-5)

    print("KERNEL_OK")
</pallas_src>

<mosaic_0001>
module attributes {stable_mosaic.version = 11 : i64} {
  func.func @_spatial_attention_kernel(%arg0: i32, %arg1: i32, %arg2: memref<1x4x256xf32, #tpu.memory_space<vmem>>, %arg3: memref<4x1xf32, #tpu.memory_space<vmem>>, %arg4: memref<1x1x256xf32, #tpu.memory_space<vmem>>, %arg5: memref<1x256xf32, #tpu.memory_space<vmem>>, %arg6: memref<1x1xf32, #tpu.memory_space<vmem>>) attributes {dimension_semantics = [#tpu.dimension_semantics<parallel>, #tpu.dimension_semantics<arbitrary>], iteration_bounds = array<i64: 2, 1>, scalar_prefetch = 0 : i64, scratch_operands = 2 : i64, tpu.core_type = #tpu.core_type<tc>, window_params = [{transform_indices = @transform_0, window_bounds = array<i64: 1, 4, 256>}, {pipeline_mode = #tpu.pipeline_mode<synchronous>, transform_indices = @transform_1, window_bounds = array<i64: 4, 1>}, {transform_indices = @transform_2, window_bounds = array<i64: 1, 1, 256>}]} {
    %c0_i32 = arith.constant 0 : i32
    %0 = arith.cmpi eq, %arg1, %c0_i32 : i32
    %1 = arith.extui %0 : i1 to i32
    %c0_i32_0 = arith.constant 0 : i32
    %2 = arith.cmpi ne, %1, %c0_i32_0 : i32
    scf.if %2 {
      %cst_13 = arith.constant 0.000000e+00 : f32
      %22 = vector.broadcast %cst_13 : f32 to vector<1x1xf32>
      %c0_14 = arith.constant 0 : index
      %c0_15 = arith.constant 0 : index
      %23 = vector.load %arg6[%c0_14, %c0_15] : memref<1x1xf32, #tpu.memory_space<vmem>>, vector<1x1xf32>
      tpu.vector_store %arg6[%c0_14, %c0_15], %22 {strides = array<i32>} : memref<1x1xf32, #tpu.memory_space<vmem>>, vector<1x1xf32>,
    } else {
    }
    %c0 = arith.constant 0 : index
    %c0_1 = arith.constant 0 : index
    %c0_2 = arith.constant 0 : index
    %3 = vector.load %arg2[%c0, %c0_1, %c0_2] : memref<1x4x256xf32, #tpu.memory_space<vmem>>, vector<1x4x256xf32>
    %4 = vector.shape_cast %3 : vector<1x4x256xf32> to vector<4x256xf32>
    %c0_3 = arith.constant 0 : index
    %c0_4 = arith.constant 0 : index
    %5 = vector.load %arg3[%c0_3, %c0_4] : memref<4x1xf32, #tpu.memory_space<vmem>>, vector<4x1xf32>
    %6 = vector.broadcast %5 : vector<4x1xf32> to vector<4x256xf32>
    %7 = arith.mulf %4, %6 : vector<4x256xf32>
    %cst = arith.constant dense<0.000000e+00> : vector<256xf32>
    %8 = vector.multi_reduction <add>, %7, %cst [0] : vector<4x256xf32> to vector<256xf32>
    %9 = vector.shape_cast %8 : vector<256xf32> to vector<1x256xf32>
    %c256_i32 = arith.constant 256 : i32
    %10 = arith.muli %arg1, %c256_i32 : i32
    %11 = tpu.assume_multiple %10, 256 : i32
    %c0_5 = arith.constant 0 : index
    %12 = arith.index_cast %11 : i32 to index
    %13 = vector.load %arg5[%c0_5, %12] : memref<1x256xf32, #tpu.memory_space<vmem>>, vector<1x256xf32>
    tpu.vector_store %arg5[%c0_5, %12], %9 {strides = array<i32>} : memref<1x256xf32, #tpu.memory_space<vmem>>, vector<1x256xf32>,
    %c0_6 = arith.constant 0 : index
    %c0_7 = arith.constant 0 : index
    %14 = vector.load %arg6[%c0_6, %c0_7] : memref<1x1xf32, #tpu.memory_space<vmem>>, vector<1x1xf32>
    %cst_8 = arith.constant dense<0.000000e+00> : vector<1xf32>
    %15 = vector.multi_reduction <add>, %9, %cst_8 [1] : vector<1x256xf32> to vector<1xf32>
    %16 = vector.shape_cast %15 : vector<1xf32> to vector<1x1xf32>
    %17 = arith.addf %14, %16 : vector<1x1xf32>
    %c0_9 = arith.constant 0 : index
    %c0_10 = arith.constant 0 : index
    %18 = vector.load %arg6[%c0_9, %c0_10] : memref<1x1xf32, #tpu.memory_space<vmem>>, vector<1x1xf32>
    tpu.vector_store %arg6[%c0_9, %c0_10], %17 {strides = array<i32>} : memref<1x1xf32, #tpu.memory_space<vmem>>, vector<1x1xf32>,
    %c0_i32_11 = arith.constant 0 : i32
    %19 = arith.cmpi eq, %arg1, %c0_i32_11 : i32
    %20 = arith.extui %19 : i1 to i32
    %c0_i32_12 = arith.constant 0 : i32
    %21 = arith.cmpi ne, %20, %c0_i32_12 : i32
    scf.if %21 {
      %c0_13 = arith.constant 0 : index
      %c0_14 = arith.constant 0 : index
      %22 = vector.load %arg6[%c0_13, %c0_14] : memref<1x1xf32, #tpu.memory_space<vmem>>, vector<1x1xf32>
      %cst_15 = arith.constant 3.906250e-03 : f32
      %23 = vector.broadcast %cst_15 : f32 to vector<1x1xf32>
      %24 = arith.mulf %22, %23 : vector<1x1xf32>
      %c0_16 = arith.constant 0 : index
      %c0_17 = arith.constant 0 : index
      %25 = vector.load %arg5[%c0_16, %c0_17] : memref<1x256xf32, #tpu.memory_space<vmem>>, vector<1x256xf32>
      %26 = vector.broadcast %24 : vector<1x1xf32> to vector<1x256xf32>
      %27 = arith.addf %25, %26 : vector<1x256xf32>
      %28 = arith.negf %27 : vector<1x256xf32>
      %29 = math.exp %28 : vector<1x256xf32>
      %cst_18 = arith.constant 1.000000e+00 : f32
      %30 = vector.broadcast %cst_18 : f32 to vector<1x256xf32>
      %31 = arith.addf %30, %29 : vector<1x256xf32>
      %32 = arith.divf %30, %31 : vector<1x256xf32>
      %c0_19 = arith.constant 0 : index
      %c0_20 = arith.constant 0 : index
      %c0_21 = arith.constant 0 : index
      %33 = vector.load %arg4[%c0_19, %c0_20, %c0_21] : memref<1x1x256xf32, #tpu.memory_space<vmem>>, vector<1x1x256xf32>
      %34 = vector.shape_cast %33 : vector<1x1x256xf32> to vector<1x256xf32>
      %35 = vector.shape_cast %32 : vector<1x256xf32> to vector<1x1x256xf32>
      tpu.vector_store %arg4[%c0_19, %c0_20, %c0_21], %35 {strides = array<i32>} : memref<1x1x256xf32, #tpu.memory_space<vmem>>, vector<1x1x256xf32>,
    } else {
    }
    return
  }
  func.func @transform_0(%arg0: i32, %arg1: i32) -> (i32, i32, i32) {
    %c0_i32 = arith.constant 0 : i32
    %c0_i32_0 = arith.constant 0 : i32
    return %arg0, %c0_i32, %arg1 : i32, i32, i32
  }
  func.func @transform_1(%arg0: i32, %arg1: i32) -> (i32, i32) {
    %c0_i32 = arith.constant 0 : i32
    %c0_i32_0 = arith.constant 0 : i32
    %c0_i32_1 = arith.constant 0 : i32
    return %c0_i32, %c0_i32_0 : i32, i32
  }
  func.func @transform_2(%arg0: i32, %arg1: i32) -> (i32, i32, i32) {
    %c0_i32 = arith.constant 0 : i32
    %c0_i32_0 = arith.constant 0 : i32
    %c0_i32_1 = arith.constant 0 : i32
    return %arg0, %c0_i32, %c0_i32_0 : i32, i32, i32
  }
}

</mosaic_0001>

<llo_original>
// kernel: tpu_custom_call.1
$region0: #{tpu_custom_call.1}
  #allocation0 [shape = 'u32[]', space=smem, size = 0x4, offset = 0x4, fixed_abs, tag = 'smem constant byte address 0x4 - core index']
  #allocation1 [shape = 'u32[144,128]{1,0:T(1,128)}', space=vmem, size = 0x12000, scoped, tag = 'internal scratch']
  #allocation2 [shape = 'f32[1,256]{1,0:T(1,128)}', space=vmem, size = 0x400, scoped, tag = 'scratch operand']
  #allocation3 [shape = 'f32[1,1]{1,0:T(1,128)}', space=vmem, size = 0x200, scoped, tag = 'scratch operand']
  %s0 = inlined_call_operand.hbm [shape: f32[2,4,256], index: 0, kind: input, shape index: {}]
  %s1 = inlined_call_operand.vmem [shape: f32[4,1], index: 1, kind: input, shape index: {}]
  %s2 = inlined_call_operand.hbm [shape: f32[2,1,256], index: 2, kind: output, shape index: {}]
  %s3 = sld [smem:[#allocation0]]
  $region53: #{tpu_custom_call.1} parent=0
    _
  %s5 = ssub.s32 1, %s3
  %s6 = scalar_select 0, %s5, %s3
  $region1: #{tpu_custom_call.1} parent=0
    #allocation4 [shape = 'u8[8192]{0}', space=vmem, size = 0x2000, scoped, tag = 'input window, operand 0']
    #allocation5 [shape = 's32[2]{0}', space=sflag, size = 0x8, scoped, tag = 'scoped memory for tpu_custom_call.1']
    #allocation6 [shape = 's32[2]{0}', space=sflag, size = 0x8, scoped, tag = 'scoped memory for tpu_custom_call.1']
    #allocation7 [shape = 'u8[2048]{0}', space=vmem, size = 0x800, scoped, tag = 'output window, operand 0']
    %7 = vsyncpa [#allocation5], 0
    %s8 = scalar_lea.sflag [#allocation5], 1
    %9 = vsyncpa %s8, 0
    %10 = vsyncpa [#allocation6], 0
    %s11 = scalar_lea.sflag [#allocation6], 1
    %12 = vsyncpa %s11, 0
    loop: start=0, step=1, limit=4
    $region2: #{tpu_custom_call.1} parent=1 // loop_pre_header
      _
    $region3: #{tpu_custom_call.1} parent=1 // loop_header
      %s14 = sphi 0, %s18
      %p15 = scmp.ge.s32.totalorder %s14, 4
      %s21 = sphi 0, %s33
      %s22 = sphi 0, %s29
      %s23 = sphi 0, %s21
      %s24 = sphi 0, %s22
      %s25 = sphi 0, %s23
      %s26 = sphi 0, %s24
      %s38 = sphi 0, %s40
      %s41 = sphi 0, %s38
      %s42 = sphi 0, %s41
      %s58 = sphi 0, %s42
      %s62 = sphi 0, %s62
      %s64 = sphi 0, %s62
      %s65 = sphi 0, %s64
      %s79 = sphi 0, %s65
      %s85 = sphi 0, %s87
      %s88 = sphi 0, %s85
      %s89 = sphi 0, %s88
      %s105 = sphi 0, %s89
    $region4: #{tpu_custom_call.1} parent=1 // loop_header_branch
      %17 = sbr.rel (%p15) target = $region8
    $region5: #{tpu_custom_call.1} parent=1 // loop_body
      %s19 = ssub.s32 %s14, 1
      %s20 = ssub.s32 %s14, 2
      %s27 = sadd.s32 1, %s22
      %p28 = scmp.ge.s32.totalorder %s27, 1
      %s29 = scalar_select %p28, 0, %s27
      %s30 = sadd.s32 1, %s21
      %s31 = scalar_select %p28, %s30, %s21
      %p32 = scmp.ge.s32.totalorder %s31, 2
      %s33 = scalar_select %p32, 0, %s31
      %s34 = ssub.s32 %s21, %s33
      %s35 = ssub.s32 %s22, %s29
      %s36 = sor.u32 %s34, %s35
      %p37 = scmp.eq.s32.totalorder %s36, 0
      %s39 = sadd.s32 %s38, 1
      %s40 = scalar_select %p37, %s38, %s39
      %p43 = pneg %p37
      %p44 = scmp.eq.s32.totalorder %s14, 1
      %p45 = por %p43, %p44
      %p46 = scmp.ne.s32.totalorder %s38, %s41
      %p47 = scmp.eq.s32.totalorder %s14, 0
      %p48 = por %p46, %p47
      %p49 = scmp.ne.s32.totalorder %s38, %s41
      %p50 = scmp.eq.s32.totalorder %s19, 1
      %p51 = por %p49, %p50
      %p52 = scmp.ne.s32.totalorder %s41, %s42
      %p53 = scmp.eq.s32.totalorder %s19, 0
      %p54 = por %p52, %p53
      %p55 = scmp.ne.s32.totalorder %s41, %s42
      %p56 = scmp.eq.s32.totalorder %s20, 1
      %p57 = por %p55, %p56
      %p59 = scmp.ne.s32.totalorder %s42, %s58
      %p60 = scmp.eq.s32.totalorder %s20, 0
      %p61 = por %p59, %p60
      %s63 = sadd.s32 %s62, 1
      %p66 = scmp.eq.s32.totalorder %s14, 1
      %p67 = scmp.ne.s32.totalorder %s62, %s64
      %p68 = scmp.eq.s32.totalorder %s14, 0
      %p69 = por %p67, %p68
      %p70 = scmp.ne.s32.totalorder %s62, %s64
      %p71 = scmp.eq.s32.totalorder %s19, 1
      %p72 = por %p70, %p71
      %p73 = scmp.ne.s32.totalorder %s64, %s65
      %p74 = scmp.eq.s32.totalorder %s19, 0
      %p75 = por %p73, %p74
      %p76 = scmp.ne.s32.totalorder %s64, %s65
      %p77 = scmp.eq.s32.totalorder %s20, 1
      %p78 = por %p76, %p77
      %p80 = scmp.ne.s32.totalorder %s65, %s79
      %p81 = scmp.eq.s32.totalorder %s20, 0
      %p82 = por %p80, %p81
      %s83 = ssub.s32 %s21, %s33
      %p84 = scmp.eq.s32.totalorder %s83, 0
      %s86 = sadd.s32 %s85, 1
      %s87 = scalar_select %p84, %s85, %s86
      %p90 = pneg %p84
      %p91 = scmp.eq.s32.totalorder %s14, 1
      %p92 = por %p90, %p91
      %p93 = scmp.ne.s32.totalorder %s85, %s88
      %p94 = scmp.eq.s32.totalorder %s14, 0
      %p95 = por %p93, %p94
      %p96 = scmp.ne.s32.totalorder %s85, %s88
      %p97 = scmp.eq.s32.totalorder %s19, 1
      %p98 = por %p96, %p97
      %p99 = scmp.ne.s32.totalorder %s88, %s89
      %p100 = scmp.eq.s32.totalorder %s19, 0
      %p101 = por %p99, %p100
      %p102 = scmp.ne.s32.totalorder %s88, %s89
      %p103 = scmp.eq.s32.totalorder %s20, 1
      %p104 = por %p102, %p103
      %p106 = scmp.ne.s32.totalorder %s89, %s105
      %p107 = scmp.eq.s32.totalorder %s20, 0
      %p108 = por %p106, %p107
      %p109 = scmp.le.s32.totalorder 1, %s14
      %p110 = scmp.lt.s32.totalorder %s14, 3
      %p111 = pnand %p109, %p110
      %p112 = pneg %p111
      // Predicated region
      $region9: #{tpu_custom_call.1} parent=5 // pred_check
        _
      $region10: #{tpu_custom_call.1} parent=5 // pred_check_branch
        %114 = sbr.rel (%p111) target = $region12
      $region11: #{tpu_custom_call.1} parent=5 // pred_region
        %s115 = ssub.s32 %s14, 1
        // Predicated region
        $region13: #{tpu_custom_call.1} parent=11 // pred_check
          %p116 = pneg %p75
        $region14: #{tpu_custom_call.1} parent=11 // pred_check_branch
          %118 = sbr.rel (%p116) target = $region16
        $region15: #{tpu_custom_call.1} parent=11 // pred_region
          _
        $region16: #{tpu_custom_call.1} parent=11 // pred_fallthru
          _
      $region12: #{tpu_custom_call.1} parent=5 // pred_fallthru
        _
      %p119 = scmp.lt.s32.totalorder %s14, 2
      // Predicated region
      $region17: #{tpu_custom_call.1} parent=5 // pred_check
        %p120 = pneg %p119
      $region18: #{tpu_custom_call.1} parent=5 // pred_check_branch
        %122 = sbr.rel (%p120) target = $region20
      $region19: #{tpu_custom_call.1} parent=5 // pred_region
        // Predicated region
        $region21: #{tpu_custom_call.1} parent=19 // pred_check
          %p123 = pneg %p48
        $region22: #{tpu_custom_call.1} parent=19 // pred_check_branch
          %125 = sbr.rel (%p123) target = $region24
        $region23: #{tpu_custom_call.1} parent=19 // pred_region
          %s126 = sand.u32 %s38, 1
          %s127 = scalar_lea.sflag [#allocation5], %s126
          %s128 = sand.u32 %s38, 1
          %s129 = smul.addr %s128, 8
          %s130 = scalar_lea.vmem [#allocation4], %s129
          %s131 = smul.u32 2, %s22
          %s133 = ssub.s32 128, 128
          %134 = vsyncadd %s127, %s133
          %s135 = smul.addr %s21, 2
          %s136 = sadd.s32 %s131, %s135
          %s137 = smul.addr %s136, 64
          %s138 = scalar_lea.hbm %s0, %s137
          %s140 = sshll.u32 %s130, 4
          %s141 = int_to_ptr.vmem [resolvable:$true] %s140
          %143 = dma.hbm_to_vmem [thread:$0]  %s138, 128, %s141, %s127
        $region24: #{tpu_custom_call.1} parent=19 // pred_fallthru
          _
      $region20: #{tpu_custom_call.1} parent=5 // pred_fallthru
        _
      %p144 = scmp.le.s32.totalorder 1, %s14
      %p145 = scmp.lt.s32.totalorder %s14, 3
      %p146 = pnand %p144, %p145
      %p147 = pneg %p146
      // Predicated region
      $region25: #{tpu_custom_call.1} parent=5 // pred_check
        _
      $region26: #{tpu_custom_call.1} parent=5 // pred_check_branch
        %149 = sbr.rel (%p146) target = $region28
      $region27: #{tpu_custom_call.1} parent=5 // pred_region
        %s150 = ssub.s32 %s14, 1
        %s151 = sand.u32 %s41, 1
        %s152 = scalar_lea.sflag [#allocation5], %s151
        %s153 = sand.u32 %s41, 1
        %s154 = smul.addr %s153, 8
        %s155 = scalar_lea.vmem [#allocation4], %s154
        // Predicated region
        $region29: #{tpu_custom_call.1} parent=27 // pred_check
          %p156 = pneg %p54
        $region30: #{tpu_custom_call.1} parent=27 // pred_check_branch
          %158 = sbr.rel (%p156) target = $region32
        $region31: #{tpu_custom_call.1} parent=27 // pred_region
          %159 = dma.done %s152, 128
        $region32: #{tpu_custom_call.1} parent=27 // pred_fallthru
          _
        %s160 = sand.u32 %s41, 1
        %s161 = scalar_lea.sflag [#allocation5], %s160
        %s162 = sand.u32 %s41, 1
        %s163 = smul.addr %s162, 8
        %s164 = scalar_lea.vmem [#allocation4], %s163
        %p165 = pneg %p54
        %p166 = pneg %p51
        %p167 = pneg %p75
        %p168 = pneg %p72
        %p169 = pneg %p101
        %p170 = pneg %p98
        %s171 = sand.u32 %s88, 1
        %s172 = scalar_lea.sflag [#allocation6], %s171
        %s173 = sand.u32 %s88, 1
        %s174 = smul.addr %s173, 2
        %s175 = scalar_lea.vmem [#allocation7], %s174
        %s176 = smul.u32 2, %s24
        %p177 = scmp.eq.s32.totalorder %s24, 0
        // Predicated region
        $region33: #{tpu_custom_call.1} parent=27 // pred_check
          %p178 = pneg %p177
        $region34: #{tpu_custom_call.1} parent=27 // pred_check_branch
          %180 = sbr.rel (%p178) target = $region36
        $region35: #{tpu_custom_call.1} parent=27 // pred_region
          %vm181 = vcmask 0
          %182 = vst.msk [vmem:[#allocation3] sm:$0x1] %vm181, 0.0
        $region36: #{tpu_custom_call.1} parent=27 // pred_fallthru
          _
        %v183 = vld [vmem:[%s155] sm:$0xff]
        %v184 = vld [vmem:[%s1] sm:$0xf]
        %186 = vset.pattern.permute.xlu0 0
        %187 = vperm.xlu0 %186, %v184
        %v188 = vpop.permute.xlu0 %187
        %v190 = vunpack.c.l.s4 839922192
        %v191 = vunpack.c.0.s8 %v190
        %v192 = vlaneseq
        %v193 = vshrl.u32 %v192, 7
        %v194 = vsub.s32 %v191, %v193
        %v195 = vrot.slane %v188, %v194
        %v197 = vmul.f32 %v183, %v195
        %v199 = vcombine.high %v197, %v197
        %vm201 = vcmask 1043456
        %v202 = vsel %vm201, %v197, 0.0
        %v203 = vrot.slane %v202, 4
        %v204 = vadd.f32 %v202, %v203
        %v205 = vrot.slane %v204, 2
        %v206 = vadd.f32 %v204, %v205
        %v207 = vrot.slane %v206, 1
        %v208 = vadd.f32 %v206, %v207
        %v209 = vsel %vm201, %v199, 0.0
        %v210 = vrot.slane %v209, 4
        %v211 = vadd.f32 %v209, %v210
        %v212 = vrot.slane %v211, 2
        %v213 = vadd.f32 %v211, %v212
        %v214 = vrot.slane %v213, 1
        %v215 = vadd.f32 %v213, %v214
        %s216 = smul.u32 %s24, 256
        %v219 = vcombine.low %v208, %v215
        %v221 = vunpack.c.l.s4 1966171168
        %v222 = vunpack.c.0.s8 %v221
        %v223 = vlaneseq
        %v224 = vshrl.u32 %v223, 7
        %v225 = vsub.s32 %v222, %v224
        %v226 = vrot.slane %v219, %v225
        %v228 = vunpack.c.l.s4 1966171168
        %v229 = vunpack.c.0.s8 %v228
        %v230 = vlaneseq
        %v231 = vshrl.u32 %v230, 7
        %v232 = vsub.s32 %v229, %v231
        %v233 = vrot.slane %v226, %v232
        %s235 = sshra.s32 %s216, 7
        %s236 = sand.u32 %s216, 127
        %s237 = scalar_lea.vmem [#allocation2], %s235
        %v238 = vlaneseq
        %vm239 = vcmp.ge.s32.totalorder %v238, 0
        %vm240 = vcmp.lt.s32.totalorder %v238, 256
        %vm241 = vmand %vm239, %vm240
        %242 = vst.msk [vmem:[%s237] sm:$0x3] %vm241, %v233
        %v243 = vld [vmem:[#allocation3] sm:$0x1]
        %v244 = vadd.f32 %v208, %v215
        %245 = vadd.xlane.f32.xlu0 %v244
        %v246 = vpop.xlane.xlu0 %245
        %v247 = vadd.f32 %v243, %v246
        %vm248 = vcmask 0
        %249 = vst.msk [vmem:[#allocation3] sm:$0x1] %vm248, %v247
        // Predicated region
        $region37: #{tpu_custom_call.1} parent=27 // pred_check
          %p250 = pneg %p177
        $region38: #{tpu_custom_call.1} parent=27 // pred_check_branch
          %252 = sbr.rel (%p250) target = $region40
        $region39: #{tpu_custom_call.1} parent=27 // pred_region
          %v253 = vld [vmem:[#allocation3] sm:$0x1]
          %v254 = vmul.f32 %v253, 0.00390625
          %v255 = vld [vmem:[#allocation2] sm:$0x3]
          %257 = vset.pattern.permute.xlu0 0
          %258 = vperm.xlu0 %257, %v254
          %v259 = vpop.permute.xlu0 %258
          %v261 = vlaneseq
          %v262 = vshrl.u32 %v261, 7
          %v263 = vsub.s32 0, %v262
          %v264 = vrot.slane %v259, %v263
          %v265 = vadd.f32 %v255, %v264
          %v266 = vxor.u32 %v265, 2147483648
          %v267 = vmul.f32 %v266, 1.442695
          %v268 = vpow.pop %v267
          %v269 = vadd.f32 %v268, 1.0
          %v270 = vrcp.pop %v269
          %v271 = vmul.f32 1.0, %v270
          %272 = vst.msk [vmem:[%s175] sm:$0x3] %vm241, %v271
        $region40: #{tpu_custom_call.1} parent=27 // pred_fallthru
          _
        %s273 = sand.u32 %s88, 1
        %s274 = scalar_lea.sflag [#allocation6], %s273
        %s275 = sand.u32 %s88, 1
        %s276 = smul.addr %s275, 2
        %s277 = scalar_lea.vmem [#allocation7], %s276
        // Predicated region
        $region41: #{tpu_custom_call.1} parent=27 // pred_check
          %p278 = pneg %p98
        $region42: #{tpu_custom_call.1} parent=27 // pred_check_branch
          %280 = sbr.rel (%p278) target = $region44
        $region43: #{tpu_custom_call.1} parent=27 // pred_region
          %s282 = ssub.s32 32, 32
          %283 = vsyncadd %s274, %s282
          %s284 = smul.addr %s23, 2
          %s285 = smul.addr %s284, 16
          %s286 = scalar_lea.hbm %s2, %s285
          %s288 = sshll.u32 %s277, 4
          %s289 = int_to_ptr.vmem [resolvable:$true] %s288
          %291 = dma.vmem_to_hbm [thread:$0]  %s289, 32, %s286, %s274
        $region44: #{tpu_custom_call.1} parent=27 // pred_fallthru
          _
      $region28: #{tpu_custom_call.1} parent=5 // pred_fallthru
        _
      %p292 = scmp.le.s32.totalorder 2, %s14
      // Predicated region
      $region45: #{tpu_custom_call.1} parent=5 // pred_check
        %p293 = pneg %p292
      $region46: #{tpu_custom_call.1} parent=5 // pred_check_branch
        %295 = sbr.rel (%p293) target = $region48
      $region47: #{tpu_custom_call.1} parent=5 // pred_region
        %s296 = ssub.s32 %s14, 2
        // Predicated region
        $region49: #{tpu_custom_call.1} parent=47 // pred_check
          %p297 = pneg %p104
        $region50: #{tpu_custom_call.1} parent=47 // pred_check_branch
          %299 = sbr.rel (%p297) target = $region52
        $region51: #{tpu_custom_call.1} parent=47 // pred_region
          %s300 = sand.u32 %s89, 1
          %s301 = scalar_lea.sflag [#allocation6], %s300
          %s302 = sand.u32 %s89, 1
          %s303 = smul.addr %s302, 2
          %s304 = scalar_lea.vmem [#allocation7], %s303
          %305 = dma.done %s301, 32
        $region52: #{tpu_custom_call.1} parent=47 // pred_fallthru
          _
      $region48: #{tpu_custom_call.1} parent=5 // pred_fallthru
        _
    $region6: #{tpu_custom_call.1} parent=1 // loop_footer
      %s18 = sadd.s32 1, %s14
    $region7: #{tpu_custom_call.1} parent=1 // loop_footer_branch
      %13 = sbr.rel target = $region3
    $region8: #{tpu_custom_call.1} parent=1 // loop_exit
      _
    %306 = vsyncpa [#allocation5], 1
    %s307 = scalar_lea.sflag [#allocation5], 1
    %308 = vsyncpa %s307, 1
    %309 = vsyncpa [#allocation6], 1
    %s310 = scalar_lea.sflag [#allocation6], 1
    %311 = vsyncpa %s310, 1

</llo_original>
